<compile_context>
chip_gen: v7x
topology: tpu7x:2x2x1
jax: 0.10.0
libtpu: 0.0.40
codegen_flags: <defaults>
</compile_context>

<pallas_src>
import numpy as np
import jax
import jax.numpy as jnp
from jax.experimental import pallas as pl
from jax.experimental.pallas import tpu as pltpu


def _round_up(a: int, b: int) -> int:
    return (a + b - 1) // b * b


def _irreps_layout(irreps):
    """irreps: sequence of (mul, l). Returns (mul, dims, in_off, out_off, sum_d)."""
    muls = [int(m) for m, _ in irreps]
    dims = [2 * int(l) + 1 for _, l in irreps]
    if len(set(muls)) != 1:
        # torch.cat(dim=-1) in the reference requires equal batch & mul dims.
        raise ValueError("reshape requires a uniform multiplicity across irreps")
    mul = muls[0]
    sum_d = sum(dims)
    in_off, out_off = [], []
    ix = c = 0
    for d in dims:
        in_off.append(ix)
        out_off.append(c)
        ix += mul * d
        c += d
    return mul, dims, in_off, out_off, sum_d


def _permutation(mul, dims, in_off):
    """perm[dst] = src column index (dst enumerated in output lane order)."""
    perm = []
    for m in range(mul):
        for k, d in enumerate(dims):
            for t in range(d):
                perm.append(in_off[k] + m * d + t)
    return perm


def _make_concat_kernel(mul, dims, in_off):
    """Permute columns in registers; single dense store per tile."""

    def kernel(x_ref, o_ref):
        xv = x_ref[...]
        pieces = []
        for m in range(mul):
            for k, d in enumerate(dims):
                s = in_off[k] + m * d
                pieces.append(xv[:, s:s + d])
        o_ref[...] = jnp.concatenate(pieces, axis=-1)

    return kernel


def _mxu_permute_kernel(x_ref, p_ref, o_ref):
    """One-hot permutation matmul on the MXU (exact for bf16 inputs)."""
    acc = jnp.dot(x_ref[...], p_ref[...], preferred_element_type=jnp.float32)
    o_ref[...] = acc.astype(o_ref.dtype)


_SUBLANE = {4: 8, 2: 16, 1: 32}  # sublane packing multiple per itemsize


def irreps_reshape(x: jax.Array, irreps, *, target_block_bytes: int = 2 << 20,
                   use_mxu=None) -> jax.Array:
    """Pallas TPU equivalent of reshape(irreps).forward(x)."""
    mul, dims, in_off, out_off, sum_d = _irreps_layout(irreps)
    n, c_in = x.shape
    if c_in != mul * sum_d:
        raise ValueError(f"x has {c_in} channels, irreps imply {mul * sum_d}")

    perm = _permutation(mul, dims, in_off)
    if n == 0 or all(p == j for j, p in enumerate(perm)):
        # Identity column permutation: metadata-only reshape, skip the kernel.
        return x.reshape(n, mul, sum_d)

    itemsize = x.dtype.itemsize
    sub = _SUBLANE.get(itemsize, 8)
    row_bytes = c_in * itemsize

    # Byte-sized row tiles; keep the grid >= 2 steps when n allows (v7x 2 TCs).
    tile = max(sub, target_block_bytes // max(row_bytes, 1))
    tile = min(tile, _round_up(pl.cdiv(n, 2), sub))
    tile = _round_up(tile, sub)
    grid = (pl.cdiv(n, tile),)

    if use_mxu is None:
        # MXU path only where it is bit-exact without precision tricks (bf16)
        # and the resident permutation matrix is small.
        use_mxu = (x.dtype == jnp.bfloat16) and (2 * c_in * c_in * itemsize <= 4 << 20)

    out_shape = jax.ShapeDtypeStruct((n, c_in), x.dtype)
    x_spec = pl.BlockSpec((tile, c_in), lambda i: (i, 0))
    o_spec = pl.BlockSpec((tile, c_in), lambda i: (i, 0))
    bytes_accessed = 2 * n * c_in * itemsize

    if use_mxu:
        p_host = np.zeros((c_in, c_in), dtype=np.float32)
        p_host[np.asarray(perm), np.arange(c_in)] = 1.0
        p = jnp.asarray(p_host, dtype=x.dtype)
        out_flat = pl.pallas_call(
            _mxu_permute_kernel,
            out_shape=out_shape,
            grid_spec=pltpu.PrefetchScalarGridSpec(
                num_scalar_prefetch=0,
                grid=grid,
                in_specs=[x_spec,
                          pl.BlockSpec((c_in, c_in), lambda i: (0, 0))],
                out_specs=o_spec,
            ),
            compiler_params=pltpu.CompilerParams(
                dimension_semantics=("parallel",)),
            cost_estimate=pl.CostEstimate(
                flops=2 * n * c_in * c_in, transcendentals=0,
                bytes_accessed=bytes_accessed + c_in * c_in * itemsize),
        )(x, p)
    else:
        out_flat = pl.pallas_call(
            _make_concat_kernel(mul, dims, in_off),
            out_shape=out_shape,
            grid_spec=pltpu.PrefetchScalarGridSpec(
                num_scalar_prefetch=0,
                grid=grid,
                in_specs=[x_spec],
                out_specs=o_spec,
            ),
            compiler_params=pltpu.CompilerParams(
                dimension_semantics=("parallel",)),
            cost_estimate=pl.CostEstimate(
                flops=0, transcendentals=0, bytes_accessed=bytes_accessed),
        )(x)

    # out[n, m, j] == out_flat[n, m*sum_d + j]  -> row-major reshape is free.
    return out_flat.reshape(n, mul, sum_d)


def _reference(x: jax.Array, irreps) -> jax.Array:
    """Pure-JAX transcription of the PyTorch forward."""
    fields = []
    ix = 0
    for m, l in irreps:
        d = 2 * int(l) + 1
        fields.append(x[:, ix:ix + m * d].reshape(-1, m, d))
        ix += m * d
    return jnp.concatenate(fields, axis=-1)


if __name__ == "__main__":
    key = jax.random.PRNGKey(0)

    # Module-consistent shapes: irreps "8x0e + 8x1e + 8x2e"
    # -> mul = 8, dims = (1, 3, 5), input channels = 8 * (1+3+5) = 72.
    irreps = [(8, 0), (8, 1), (8, 2)]
    c_in = sum(m * (2 * l + 1) for m, l in irreps)
    n = 50  # not a multiple of the tile -> exercises the ragged (masked) last block

    # f32: register-concat path.
    x32 = jax.random.normal(key, (n, c_in), dtype=jnp.float32)
    out32 = jax.block_until_ready(irreps_reshape(x32, irreps))
    ref32 = _reference(x32, irreps)
    assert out32.shape == (n, 8, 9), out32.shape
    assert out32.dtype == x32.dtype
    assert jnp.array_equal(out32, ref32)

    # bf16: resident one-hot MXU permutation path (bit-exact round trip).
    xbf = x32.astype(jnp.bfloat16)
    outbf = jax.block_until_ready(irreps_reshape(xbf, irreps))
    refbf = _reference(xbf, irreps)
    assert outbf.shape == (n, 8, 9) and outbf.dtype == jnp.bfloat16
    assert jnp.array_equal(outbf, refbf)

    # Identity permutation (single irrep): wrapper short-circuit, no kernel.
    x_id = jax.random.normal(key, (n, 16 * 3), dtype=jnp.float32)
    out_id = jax.block_until_ready(irreps_reshape(x_id, [(16, 1)]))
    assert jnp.array_equal(out_id, _reference(x_id, [(16, 1)]))

    print("KERNEL_OK")
</pallas_src>

<mosaic_0001>
module attributes {stable_mosaic.version = 11 : i64} {
  func.func @kernel(%arg0: i32, %arg1: memref<32x72xf32, #tpu.memory_space<vmem>>, %arg2: memref<32x72xf32, #tpu.memory_space<vmem>>) attributes {dimension_semantics = [#tpu.dimension_semantics<parallel>], iteration_bounds = array<i64: 2>, scalar_prefetch = 0 : i64, scratch_operands = 0 : i64, tpu.core_type = #tpu.core_type<tc>, window_params = [{transform_indices = @transform_0, window_bounds = array<i64: 32, 72>}, {transform_indices = @transform_1, window_bounds = array<i64: 32, 72>}]} {
    %c0 = arith.constant 0 : index
    %c0_0 = arith.constant 0 : index
    %0 = vector.load %arg1[%c0, %c0_0] : memref<32x72xf32, #tpu.memory_space<vmem>>, vector<32x72xf32>
    %1 = vector.extract_strided_slice %0 {offsets = [0, 0], sizes = [32, 1], strides = [1, 1]} : vector<32x72xf32> to vector<32x1xf32>
    %2 = vector.extract_strided_slice %0 {offsets = [0, 8], sizes = [32, 3], strides = [1, 1]} : vector<32x72xf32> to vector<32x3xf32>
    %3 = vector.extract_strided_slice %0 {offsets = [0, 32], sizes = [32, 5], strides = [1, 1]} : vector<32x72xf32> to vector<32x5xf32>
    %4 = vector.extract_strided_slice %0 {offsets = [0, 1], sizes = [32, 1], strides = [1, 1]} : vector<32x72xf32> to vector<32x1xf32>
    %5 = vector.extract_strided_slice %0 {offsets = [0, 11], sizes = [32, 3], strides = [1, 1]} : vector<32x72xf32> to vector<32x3xf32>
    %6 = vector.extract_strided_slice %0 {offsets = [0, 37], sizes = [32, 5], strides = [1, 1]} : vector<32x72xf32> to vector<32x5xf32>
    %7 = vector.extract_strided_slice %0 {offsets = [0, 2], sizes = [32, 1], strides = [1, 1]} : vector<32x72xf32> to vector<32x1xf32>
    %8 = vector.extract_strided_slice %0 {offsets = [0, 14], sizes = [32, 3], strides = [1, 1]} : vector<32x72xf32> to vector<32x3xf32>
    %9 = vector.extract_strided_slice %0 {offsets = [0, 42], sizes = [32, 5], strides = [1, 1]} : vector<32x72xf32> to vector<32x5xf32>
    %10 = vector.extract_strided_slice %0 {offsets = [0, 3], sizes = [32, 1], strides = [1, 1]} : vector<32x72xf32> to vector<32x1xf32>
    %11 = vector.extract_strided_slice %0 {offsets = [0, 17], sizes = [32, 3], strides = [1, 1]} : vector<32x72xf32> to vector<32x3xf32>
    %12 = vector.extract_strided_slice %0 {offsets = [0, 47], sizes = [32, 5], strides = [1, 1]} : vector<32x72xf32> to vector<32x5xf32>
    %13 = vector.extract_strided_slice %0 {offsets = [0, 4], sizes = [32, 1], strides = [1, 1]} : vector<32x72xf32> to vector<32x1xf32>
    %14 = vector.extract_strided_slice %0 {offsets = [0, 20], sizes = [32, 3], strides = [1, 1]} : vector<32x72xf32> to vector<32x3xf32>
    %15 = vector.extract_strided_slice %0 {offsets = [0, 52], sizes = [32, 5], strides = [1, 1]} : vector<32x72xf32> to vector<32x5xf32>
    %16 = vector.extract_strided_slice %0 {offsets = [0, 5], sizes = [32, 1], strides = [1, 1]} : vector<32x72xf32> to vector<32x1xf32>
    %17 = vector.extract_strided_slice %0 {offsets = [0, 23], sizes = [32, 3], strides = [1, 1]} : vector<32x72xf32> to vector<32x3xf32>
    %18 = vector.extract_strided_slice %0 {offsets = [0, 57], sizes = [32, 5], strides = [1, 1]} : vector<32x72xf32> to vector<32x5xf32>
    %19 = vector.extract_strided_slice %0 {offsets = [0, 6], sizes = [32, 1], strides = [1, 1]} : vector<32x72xf32> to vector<32x1xf32>
    %20 = vector.extract_strided_slice %0 {offsets = [0, 26], sizes = [32, 3], strides = [1, 1]} : vector<32x72xf32> to vector<32x3xf32>
    %21 = vector.extract_strided_slice %0 {offsets = [0, 62], sizes = [32, 5], strides = [1, 1]} : vector<32x72xf32> to vector<32x5xf32>
    %22 = vector.extract_strided_slice %0 {offsets = [0, 7], sizes = [32, 1], strides = [1, 1]} : vector<32x72xf32> to vector<32x1xf32>
    %23 = vector.extract_strided_slice %0 {offsets = [0, 29], sizes = [32, 3], strides = [1, 1]} : vector<32x72xf32> to vector<32x3xf32>
    %24 = vector.extract_strided_slice %0 {offsets = [0, 67], sizes = [32, 5], strides = [1, 1]} : vector<32x72xf32> to vector<32x5xf32>
    %25 = tpu.concatenate %1, %2, %3, %4, %5, %6, %7, %8, %9, %10, %11, %12, %13, %14, %15, %16 in 1 : vector<32x1xf32>, vector<32x3xf32>, vector<32x5xf32>, vector<32x1xf32>, vector<32x3xf32>, vector<32x5xf32>, vector<32x1xf32>, vector<32x3xf32>, vector<32x5xf32>, vector<32x1xf32>, vector<32x3xf32>, vector<32x5xf32>, vector<32x1xf32>, vector<32x3xf32>, vector<32x5xf32>, vector<32x1xf32> -> vector<32x46xf32>
    %26 = tpu.concatenate %17, %18, %19, %20, %21, %22, %23, %24 in 1 : vector<32x3xf32>, vector<32x5xf32>, vector<32x1xf32>, vector<32x3xf32>, vector<32x5xf32>, vector<32x1xf32>, vector<32x3xf32>, vector<32x5xf32> -> vector<32x26xf32>
    %27 = tpu.concatenate %25, %26 in 1 : vector<32x46xf32>, vector<32x26xf32> -> vector<32x72xf32>
    %c0_1 = arith.constant 0 : index
    %c0_2 = arith.constant 0 : index
    %28 = vector.load %arg2[%c0_1, %c0_2] : memref<32x72xf32, #tpu.memory_space<vmem>>, vector<32x72xf32>
    tpu.vector_store %arg2[%c0_1, %c0_2], %27 {strides = array<i32>} : memref<32x72xf32, #tpu.memory_space<vmem>>, vector<32x72xf32>,
    return
  }
  func.func @transform_0(%arg0: i32) -> (i32, i32) {
    %c0_i32 = arith.constant 0 : i32
    %c0_i32_0 = arith.constant 0 : i32
    return %arg0, %c0_i32 : i32, i32
  }
  func.func @transform_1(%arg0: i32) -> (i32, i32) {
    %c0_i32 = arith.constant 0 : i32
    %c0_i32_0 = arith.constant 0 : i32
    return %arg0, %c0_i32 : i32, i32
  }
}

</mosaic_0001>

<llo_original>
// kernel: tpu_custom_call.1
$region0: #{tpu_custom_call.1}
  #allocation0 [shape = 'u32[]', space=smem, size = 0x4, offset = 0x4, fixed_abs, tag = 'smem constant byte address 0x4 - core index']
  #allocation1 [shape = 'u32[144,128]{1,0:T(1,128)}', space=vmem, size = 0x12000, scoped, tag = 'internal scratch']
  %s0 = inlined_call_operand.hbm [shape: f32[50,72], index: 0, kind: input, shape index: {}]
  %s1 = inlined_call_operand.hbm [shape: f32[50,72], index: 1, kind: output, shape index: {}]
  %s2 = sld [smem:[#allocation0]]
  $region41: #{tpu_custom_call.1} parent=0
    _
  %s4 = ssub.s32 1, %s2
  %s5 = scalar_select 0, %s4, %s2
  $region1: #{tpu_custom_call.1} parent=0
    #allocation2 [shape = 'u8[32768]{0}', space=vmem, size = 0x8000, scoped, tag = 'input window, operand 0']
    #allocation3 [shape = 's32[2]{0}', space=sflag, size = 0x8, scoped, tag = 'scoped memory for tpu_custom_call.1']
    #allocation4 [shape = 's32[2]{0}', space=sflag, size = 0x8, scoped, tag = 'scoped memory for tpu_custom_call.1']
    #allocation5 [shape = 'u8[32768]{0}', space=vmem, size = 0x8000, scoped, tag = 'output window, operand 0']
    %6 = vsyncpa [#allocation3], 0
    %s7 = scalar_lea.sflag [#allocation3], 1
    %8 = vsyncpa %s7, 0
    %9 = vsyncpa [#allocation4], 0
    %s10 = scalar_lea.sflag [#allocation4], 1
    %11 = vsyncpa %s10, 0
    loop: start=0, step=1, limit=4
    $region2: #{tpu_custom_call.1} parent=1 // loop_pre_header
      _
    $region3: #{tpu_custom_call.1} parent=1 // loop_header
      %s13 = sphi 0, %s17
      %p14 = scmp.ge.s32.totalorder %s13, 4
      %s23 = sphi 0, %s25
      %s26 = sphi 0, %s23
      %s27 = sphi 0, %s26
      %s43 = sphi 0, %s27
      %s49 = sphi 0, %s51
      %s52 = sphi 0, %s49
      %s53 = sphi 0, %s52
      %s69 = sphi 0, %s53
    $region4: #{tpu_custom_call.1} parent=1 // loop_header_branch
      %16 = sbr.rel (%p14) target = $region8
    $region5: #{tpu_custom_call.1} parent=1 // loop_body
      %s18 = ssub.s32 %s13, 1
      %s19 = ssub.s32 %s13, 2
      %s20 = sadd.s32 %s13, 1
      %s21 = ssub.s32 %s13, %s20
      %p22 = scmp.eq.s32.totalorder %s21, 0
      %s24 = sadd.s32 %s23, 1
      %s25 = scalar_select %p22, %s23, %s24
      %p28 = pneg %p22
      %p29 = scmp.eq.s32.totalorder %s13, 1
      %p30 = por %p28, %p29
      %p31 = scmp.ne.s32.totalorder %s23, %s26
      %p32 = scmp.eq.s32.totalorder %s13, 0
      %p33 = por %p31, %p32
      %p34 = scmp.ne.s32.totalorder %s23, %s26
      %p35 = scmp.eq.s32.totalorder %s18, 1
      %p36 = por %p34, %p35
      %p37 = scmp.ne.s32.totalorder %s26, %s27
      %p38 = scmp.eq.s32.totalorder %s18, 0
      %p39 = por %p37, %p38
      %p40 = scmp.ne.s32.totalorder %s26, %s27
      %p41 = scmp.eq.s32.totalorder %s19, 1
      %p42 = por %p40, %p41
      %p44 = scmp.ne.s32.totalorder %s27, %s43
      %p45 = scmp.eq.s32.totalorder %s19, 0
      %p46 = por %p44, %p45
      %s47 = ssub.s32 %s13, %s20
      %p48 = scmp.eq.s32.totalorder %s47, 0
      %s50 = sadd.s32 %s49, 1
      %s51 = scalar_select %p48, %s49, %s50
      %p54 = pneg %p48
      %p55 = scmp.eq.s32.totalorder %s13, 1
      %p56 = por %p54, %p55
      %p57 = scmp.ne.s32.totalorder %s49, %s52
      %p58 = scmp.eq.s32.totalorder %s13, 0
      %p59 = por %p57, %p58
      %p60 = scmp.ne.s32.totalorder %s49, %s52
      %p61 = scmp.eq.s32.totalorder %s18, 1
      %p62 = por %p60, %p61
      %p63 = scmp.ne.s32.totalorder %s52, %s53
      %p64 = scmp.eq.s32.totalorder %s18, 0
      %p65 = por %p63, %p64
      %p66 = scmp.ne.s32.totalorder %s52, %s53
      %p67 = scmp.eq.s32.totalorder %s19, 1
      %p68 = por %p66, %p67
      %p70 = scmp.ne.s32.totalorder %s53, %s69
      %p71 = scmp.eq.s32.totalorder %s19, 0
      %p72 = por %p70, %p71
      %p73 = scmp.le.s32.totalorder 1, %s13
      %p74 = scmp.lt.s32.totalorder %s13, 3
      %p75 = pnand %p73, %p74
      %p76 = pneg %p75
      // Predicated region
      $region9: #{tpu_custom_call.1} parent=5 // pred_check
        _
      $region10: #{tpu_custom_call.1} parent=5 // pred_check_branch
        %78 = sbr.rel (%p75) target = $region12
      $region11: #{tpu_custom_call.1} parent=5 // pred_region
        %s79 = ssub.s32 %s13, 1
      $region12: #{tpu_custom_call.1} parent=5 // pred_fallthru
        _
      %p80 = scmp.lt.s32.totalorder %s13, 2
      // Predicated region
      $region13: #{tpu_custom_call.1} parent=5 // pred_check
        %p81 = pneg %p80
      $region14: #{tpu_custom_call.1} parent=5 // pred_check_branch
        %83 = sbr.rel (%p81) target = $region16
      $region15: #{tpu_custom_call.1} parent=5 // pred_region
        // Predicated region
        $region17: #{tpu_custom_call.1} parent=15 // pred_check
          %p84 = pneg %p33
        $region18: #{tpu_custom_call.1} parent=15 // pred_check_branch
          %86 = sbr.rel (%p84) target = $region20
        $region19: #{tpu_custom_call.1} parent=15 // pred_region
          %s87 = sand.u32 %s23, 1
          %s88 = scalar_lea.sflag [#allocation3], %s87
          %s89 = sand.u32 %s23, 1
          %s90 = smul.addr %s89, 32
          %s91 = scalar_lea.vmem [#allocation2], %s90
          %s92 = smul.u32 4, %s13
          %s93 = ssub.s32 7, %s92
          %p94 = scmp.lt.s32.totalorder %s93, 4
          %s95 = scalar_select %p94, %s93, 4
          %s96 = smul.u32 128, %s95
          %s98 = ssub.s32 512, %s96
          %99 = vsyncadd %s88, %s98
          %p100 = scmp.ne.s32.totalorder 0, %s96
          %s101 = smul.addr %s92, 128
          %s102 = scalar_lea.hbm %s0, %s101
          %s103 = smul.u32 8, %s95
          %s104 = sshll.u32 %s91, 4
          %s105 = int_to_ptr.vmem [resolvable:$true] %s104
          %s106 = sshll.u32 %s103, 4
          %110 = dma.hbm_to_vmem [thread:$0]  (%p100), %s102, %s106, %s105, %s88, 128, 128, 8
        $region20: #{tpu_custom_call.1} parent=15 // pred_fallthru
          _
      $region16: #{tpu_custom_call.1} parent=5 // pred_fallthru
        _
      %p111 = scmp.le.s32.totalorder 1, %s13
      %p112 = scmp.lt.s32.totalorder %s13, 3
      %p113 = pnand %p111, %p112
      %p114 = pneg %p113
      // Predicated region
      $region21: #{tpu_custom_call.1} parent=5 // pred_check
        _
      $region22: #{tpu_custom_call.1} parent=5 // pred_check_branch
        %116 = sbr.rel (%p113) target = $region24
      $region23: #{tpu_custom_call.1} parent=5 // pred_region
        %s117 = ssub.s32 %s13, 1
        %s118 = sand.u32 %s26, 1
        %s119 = scalar_lea.sflag [#allocation3], %s118
        %s120 = sand.u32 %s26, 1
        %s121 = smul.addr %s120, 32
        %s122 = scalar_lea.vmem [#allocation2], %s121
        // Predicated region
        $region25: #{tpu_custom_call.1} parent=23 // pred_check
          %p123 = pneg %p39
        $region26: #{tpu_custom_call.1} parent=23 // pred_check_branch
          %125 = sbr.rel (%p123) target = $region28
        $region27: #{tpu_custom_call.1} parent=23 // pred_region
          %126 = dma.done %s119, 512
        $region28: #{tpu_custom_call.1} parent=23 // pred_fallthru
          _
        %s127 = sand.u32 %s26, 1
        %s128 = scalar_lea.sflag [#allocation3], %s127
        %s129 = sand.u32 %s26, 1
        %s130 = smul.addr %s129, 32
        %s131 = scalar_lea.vmem [#allocation2], %s130
        %p132 = pneg %p39
        %p133 = pneg %p36
        %p134 = pneg %p65
        %p135 = pneg %p62
        %s136 = sand.u32 %s52, 1
        %s137 = scalar_lea.sflag [#allocation4], %s136
        %s138 = sand.u32 %s52, 1
        %s139 = smul.addr %s138, 32
        %s140 = scalar_lea.vmem [#allocation5], %s139
        %s141 = smul.u32 4, %s18
        %s142 = ssub.s32 7, %s141
        %p143 = scmp.lt.s32.totalorder %s142, 4
        %s144 = scalar_select %p143, %s142, 4
        %s145 = smul.u32 128, %s144
        %s146 = smul.u32 4, %s18
        %s147 = ssub.s32 7, %s146
        %p148 = scmp.lt.s32.totalorder %s147, 4
        %s149 = scalar_select %p148, %s147, 4
        %s150 = smul.u32 128, %s149
        %v151 = vld [vmem:[%s122] sm:$0xff]
        %v152 = vld [vmem:[%s122 + $0x8] sm:$0xff]
        %v153 = vld [vmem:[%s122 + $0x10] sm:$0xff]
        %v154 = vld [vmem:[%s122 + $0x18] sm:$0xff]
        %159 = vrot.lane.b32.xlu0 %v151, 121
        %v160 = vpop.permute.xlu0 %159
        %161 = vrot.lane.b32.xlu0 %v152, 121
        %v162 = vpop.permute.xlu0 %161
        %163 = vrot.lane.b32.xlu0 %v153, 121
        %v164 = vpop.permute.xlu0 %163
        %165 = vrot.lane.b32.xlu0 %v154, 121
        %v166 = vpop.permute.xlu0 %165
        %171 = vrot.lane.b32.xlu0 %v151, 100
        %v172 = vpop.permute.xlu0 %171
        %173 = vrot.lane.b32.xlu0 %v152, 100
        %v174 = vpop.permute.xlu0 %173
        %175 = vrot.lane.b32.xlu0 %v153, 100
        %v176 = vpop.permute.xlu0 %175
        %177 = vrot.lane.b32.xlu0 %v154, 100
        %v178 = vpop.permute.xlu0 %177
        %183 = vrot.lane.b32.xlu0 %v151, 8
        %v184 = vpop.permute.xlu0 %183
        %185 = vrot.lane.b32.xlu0 %v152, 8
        %v186 = vpop.permute.xlu0 %185
        %187 = vrot.lane.b32.xlu0 %v153, 8
        %v188 = vpop.permute.xlu0 %187
        %189 = vrot.lane.b32.xlu0 %v154, 8
        %v190 = vpop.permute.xlu0 %189
        %195 = vrot.lane.b32.xlu0 %v151, 127
        %v196 = vpop.permute.xlu0 %195
        %197 = vrot.lane.b32.xlu0 %v152, 127
        %v198 = vpop.permute.xlu0 %197
        %199 = vrot.lane.b32.xlu0 %v153, 127
        %v200 = vpop.permute.xlu0 %199
        %201 = vrot.lane.b32.xlu0 %v154, 127
        %v202 = vpop.permute.xlu0 %201
        %207 = vrot.lane.b32.xlu0 %v151, 104
        %v208 = vpop.permute.xlu0 %207
        %209 = vrot.lane.b32.xlu0 %v152, 104
        %v210 = vpop.permute.xlu0 %209
        %211 = vrot.lane.b32.xlu0 %v153, 104
        %v212 = vpop.permute.xlu0 %211
        %213 = vrot.lane.b32.xlu0 %v154, 104
        %v214 = vpop.permute.xlu0 %213
        %219 = vrot.lane.b32.xlu0 %v151, 16
        %v220 = vpop.permute.xlu0 %219
        %221 = vrot.lane.b32.xlu0 %v152, 16
        %v222 = vpop.permute.xlu0 %221
        %223 = vrot.lane.b32.xlu0 %v153, 16
        %v224 = vpop.permute.xlu0 %223
        %225 = vrot.lane.b32.xlu0 %v154, 16
        %v226 = vpop.permute.xlu0 %225
        %231 = vrot.lane.b32.xlu0 %v151, 5
        %v232 = vpop.permute.xlu0 %231
        %233 = vrot.lane.b32.xlu0 %v152, 5
        %v234 = vpop.permute.xlu0 %233
        %235 = vrot.lane.b32.xlu0 %v153, 5
        %v236 = vpop.permute.xlu0 %235
        %237 = vrot.lane.b32.xlu0 %v154, 5
        %v238 = vpop.permute.xlu0 %237
        %243 = vrot.lane.b32.xlu0 %v151, 108
        %v244 = vpop.permute.xlu0 %243
        %245 = vrot.lane.b32.xlu0 %v152, 108
        %v246 = vpop.permute.xlu0 %245
        %247 = vrot.lane.b32.xlu0 %v153, 108
        %v248 = vpop.permute.xlu0 %247
        %249 = vrot.lane.b32.xlu0 %v154, 108
        %v250 = vpop.permute.xlu0 %249
        %255 = vrot.lane.b32.xlu0 %v151, 24
        %v256 = vpop.permute.xlu0 %255
        %257 = vrot.lane.b32.xlu0 %v152, 24
        %v258 = vpop.permute.xlu0 %257
        %259 = vrot.lane.b32.xlu0 %v153, 24
        %v260 = vpop.permute.xlu0 %259
        %261 = vrot.lane.b32.xlu0 %v154, 24
        %v262 = vpop.permute.xlu0 %261
        %267 = vrot.lane.b32.xlu0 %v151, 11
        %v268 = vpop.permute.xlu0 %267
        %269 = vrot.lane.b32.xlu0 %v152, 11
        %v270 = vpop.permute.xlu0 %269
        %271 = vrot.lane.b32.xlu0 %v153, 11
        %v272 = vpop.permute.xlu0 %271
        %273 = vrot.lane.b32.xlu0 %v154, 11
        %v274 = vpop.permute.xlu0 %273
        %279 = vrot.lane.b32.xlu0 %v151, 112
        %v280 = vpop.permute.xlu0 %279
        %281 = vrot.lane.b32.xlu0 %v152, 112
        %v282 = vpop.permute.xlu0 %281
        %283 = vrot.lane.b32.xlu0 %v153, 112
        %v284 = vpop.permute.xlu0 %283
        %285 = vrot.lane.b32.xlu0 %v154, 112
        %v286 = vpop.permute.xlu0 %285
        %291 = vrot.lane.b32.xlu0 %v151, 32
        %v292 = vpop.permute.xlu0 %291
        %293 = vrot.lane.b32.xlu0 %v152, 32
        %v294 = vpop.permute.xlu0 %293
        %295 = vrot.lane.b32.xlu0 %v153, 32
        %v296 = vpop.permute.xlu0 %295
        %297 = vrot.lane.b32.xlu0 %v154, 32
        %v298 = vpop.permute.xlu0 %297
        %303 = vrot.lane.b32.xlu0 %v151, 17
        %v304 = vpop.permute.xlu0 %303
        %305 = vrot.lane.b32.xlu0 %v152, 17
        %v306 = vpop.permute.xlu0 %305
        %307 = vrot.lane.b32.xlu0 %v153, 17
        %v308 = vpop.permute.xlu0 %307
        %309 = vrot.lane.b32.xlu0 %v154, 17
        %v310 = vpop.permute.xlu0 %309
        %315 = vrot.lane.b32.xlu0 %v151, 116
        %v316 = vpop.permute.xlu0 %315
        %317 = vrot.lane.b32.xlu0 %v152, 116
        %v318 = vpop.permute.xlu0 %317
        %319 = vrot.lane.b32.xlu0 %v153, 116
        %v320 = vpop.permute.xlu0 %319
        %321 = vrot.lane.b32.xlu0 %v154, 116
        %v322 = vpop.permute.xlu0 %321
        %327 = vrot.lane.b32.xlu0 %v151, 40
        %v328 = vpop.permute.xlu0 %327
        %329 = vrot.lane.b32.xlu0 %v152, 40
        %v330 = vpop.permute.xlu0 %329
        %331 = vrot.lane.b32.xlu0 %v153, 40
        %v332 = vpop.permute.xlu0 %331
        %333 = vrot.lane.b32.xlu0 %v154, 40
        %v334 = vpop.permute.xlu0 %333
        %vm339 = vcmask 7168
        %v340 = vsel %vm339, %v151, %v160
        %v341 = vsel %vm339, %v152, %v162
        %v342 = vsel %vm339, %v153, %v164
        %v343 = vsel %vm339, %v154, %v166
        %vm344 = vcmask 31744
        %v345 = vsel %vm344, %v340, %v172
        %v346 = vsel %vm344, %v341, %v174
        %v347 = vsel %vm344, %v342, %v176
        %v348 = vsel %vm344, %v343, %v178
        %vm349 = vcmask 72704
        %v350 = vsel %vm349, %v345, %v184
        %v351 = vsel %vm349, %v346, %v186
        %v352 = vsel %vm349, %v347, %v188
        %v353 = vsel %vm349, %v348, %v190
        %vm354 = vcmask 80896
        %v355 = vsel %vm354, %v350, %v196
        %v356 = vsel %vm354, %v351, %v198
        %v357 = vsel %vm354, %v352, %v200
        %v358 = vsel %vm354, %v353, %v202
        %vm359 = vcmask 105472
        %v360 = vsel %vm359, %v355, %v208
        %v361 = vsel %vm359, %v356, %v210
        %v362 = vsel %vm359, %v357, %v212
        %v363 = vsel %vm359, %v358, %v214
        %vm364 = vcmask 146432
        %v365 = vsel %vm364, %v360, %v220
        %v366 = vsel %vm364, %v361, %v222
        %v367 = vsel %vm364, %v362, %v224
        %v368 = vsel %vm364, %v363, %v226
        %vm369 = vcmask 154624
        %v370 = vsel %vm369, %v365, %v232
        %v371 = vsel %vm369, %v366, %v234
        %v372 = vsel %vm369, %v367, %v236
        %v373 = vsel %vm369, %v368, %v238
        %vm374 = vcmask 179200
        %v375 = vsel %vm374, %v370, %v244
        %v376 = vsel %vm374, %v371, %v246
        %v377 = vsel %vm374, %v372, %v248
        %v378 = vsel %vm374, %v373, %v250
        %vm379 = vcmask 220160
        %v380 = vsel %vm379, %v375, %v256
        %v381 = vsel %vm379, %v376, %v258
        %v382 = vsel %vm379, %v377, %v260
        %v383 = vsel %vm379, %v378, %v262
        %vm384 = vcmask 228352
        %v385 = vsel %vm384, %v380, %v268
        %v386 = vsel %vm384, %v381, %v270
        %v387 = vsel %vm384, %v382, %v272
        %v388 = vsel %vm384, %v383, %v274
        %vm389 = vcmask 252928
        %v390 = vsel %vm389, %v385, %v280
        %v391 = vsel %vm389, %v386, %v282
        %v392 = vsel %vm389, %v387, %v284
        %v393 = vsel %vm389, %v388, %v286
        %vm394 = vcmask 293888
        %v395 = vsel %vm394, %v390, %v292
        %v396 = vsel %vm394, %v391, %v294
        %v397 = vsel %vm394, %v392, %v296
        %v398 = vsel %vm394, %v393, %v298
        %vm399 = vcmask 302080
        %v400 = vsel %vm399, %v395, %v304
        %v401 = vsel %vm399, %v396, %v306
        %v402 = vsel %vm399, %v397, %v308
        %v403 = vsel %vm399, %v398, %v310
        %vm404 = vcmask 326656
        %v405 = vsel %vm404, %v400, %v316
        %v406 = vsel %vm404, %v401, %v318
        %v407 = vsel %vm404, %v402, %v320
        %v408 = vsel %vm404, %v403, %v322
        %vm409 = vcmask 367616
        %v410 = vsel %vm409, %v405, %v328
        %v411 = vsel %vm409, %v406, %v330
        %v412 = vsel %vm409, %v407, %v332
        %v413 = vsel %vm409, %v408, %v334
        %414 = vrot.lane.b32.xlu0 %v151, 105
        %v415 = vpop.permute.xlu0 %414
        %416 = vrot.lane.b32.xlu0 %v152, 105
        %v417 = vpop.permute.xlu0 %416
        %418 = vrot.lane.b32.xlu0 %v153, 105
        %v419 = vpop.permute.xlu0 %418
        %420 = vrot.lane.b32.xlu0 %v154, 105
        %v421 = vpop.permute.xlu0 %420
        %426 = vrot.lane.b32.xlu0 %v151, 74
        %v427 = vpop.permute.xlu0 %426
        %428 = vrot.lane.b32.xlu0 %v152, 74
        %v429 = vpop.permute.xlu0 %428
        %430 = vrot.lane.b32.xlu0 %v153, 74
        %v431 = vpop.permute.xlu0 %430
        %432 = vrot.lane.b32.xlu0 %v154, 74
        %v433 = vpop.permute.xlu0 %432
        %438 = vrot.lane.b32.xlu0 %v151, 2
        %v439 = vpop.permute.xlu0 %438
        %440 = vrot.lane.b32.xlu0 %v152, 2
        %v441 = vpop.permute.xlu0 %440
        %442 = vrot.lane.b32.xlu0 %v153, 2
        %v443 = vpop.permute.xlu0 %442
        %444 = vrot.lane.b32.xlu0 %v154, 2
        %v445 = vpop.permute.xlu0 %444
        %450 = vrot.lane.b32.xlu0 %v151, 111
        %v451 = vpop.permute.xlu0 %450
        %452 = vrot.lane.b32.xlu0 %v152, 111
        %v453 = vpop.permute.xlu0 %452
        %454 = vrot.lane.b32.xlu0 %v153, 111
        %v455 = vpop.permute.xlu0 %454
        %456 = vrot.lane.b32.xlu0 %v154, 111
        %v457 = vpop.permute.xlu0 %456
        %462 = vrot.lane.b32.xlu0 %v151, 78
        %v463 = vpop.permute.xlu0 %462
        %464 = vrot.lane.b32.xlu0 %v152, 78
        %v465 = vpop.permute.xlu0 %464
        %466 = vrot.lane.b32.xlu0 %v153, 78
        %v467 = vpop.permute.xlu0 %466
        %468 = vrot.lane.b32.xlu0 %v154, 78
        %v469 = vpop.permute.xlu0 %468
        %474 = vrot.lane.b32.xlu0 %v151, 10
        %v475 = vpop.permute.xlu0 %474
        %476 = vrot.lane.b32.xlu0 %v152, 10
        %v477 = vpop.permute.xlu0 %476
        %478 = vrot.lane.b32.xlu0 %v153, 10
        %v479 = vpop.permute.xlu0 %478
        %480 = vrot.lane.b32.xlu0 %v154, 10
        %v481 = vpop.permute.xlu0 %480
        %486 = vrot.lane.b32.xlu0 %v151, 117
        %v487 = vpop.permute.xlu0 %486
        %488 = vrot.lane.b32.xlu0 %v152, 117
        %v489 = vpop.permute.xlu0 %488
        %490 = vrot.lane.b32.xlu0 %v153, 117
        %v491 = vpop.permute.xlu0 %490
        %492 = vrot.lane.b32.xlu0 %v154, 117
        %v493 = vpop.permute.xlu0 %492
        %498 = vrot.lane.b32.xlu0 %v151, 82
        %v499 = vpop.permute.xlu0 %498
        %500 = vrot.lane.b32.xlu0 %v152, 82
        %v501 = vpop.permute.xlu0 %500
        %502 = vrot.lane.b32.xlu0 %v153, 82
        %v503 = vpop.permute.xlu0 %502
        %504 = vrot.lane.b32.xlu0 %v154, 82
        %v505 = vpop.permute.xlu0 %504
        %vm510 = vcmask 23552
        %v511 = vsel %vm510, %v415, %v427
        %v512 = vsel %vm510, %v417, %v429
        %v513 = vsel %vm510, %v419, %v431
        %v514 = vsel %vm510, %v421, %v433
        %vm515 = vcmask 64512
        %v516 = vsel %vm515, %v511, %v439
        %v517 = vsel %vm515, %v512, %v441
        %v518 = vsel %vm515, %v513, %v443
        %v519 = vsel %vm515, %v514, %v445
        %v520 = vsel %vm349, %v516, %v451
        %v521 = vsel %vm349, %v517, %v453
        %v522 = vsel %vm349, %v518, %v455
        %v523 = vsel %vm349, %v519, %v457
        %vm524 = vcmask 97280
        %v525 = vsel %vm524, %v520, %v463
        %v526 = vsel %vm524, %v521, %v465
        %v527 = vsel %vm524, %v522, %v467
        %v528 = vsel %vm524, %v523, %v469
        %vm529 = vcmask 138240
        %v530 = vsel %vm529, %v525, %v475
        %v531 = vsel %vm529, %v526, %v477
        %v532 = vsel %vm529, %v527, %v479
        %v533 = vsel %vm529, %v528, %v481
        %v534 = vsel %vm364, %v530, %v487
        %v535 = vsel %vm364, %v531, %v489
        %v536 = vsel %vm364, %v532, %v491
        %v537 = vsel %vm364, %v533, %v493
        %vm538 = vcmask 171008
        %v539 = vsel %vm538, %v534, %v499
        %v540 = vsel %vm538, %v535, %v501
        %v541 = vsel %vm538, %v536, %v503
        %v542 = vsel %vm538, %v537, %v505
        %547 = vrot.lane.b32.xlu0 %v539, 46
        %v548 = vpop.permute.xlu0 %547
        %549 = vrot.lane.b32.xlu0 %v540, 46
        %v550 = vpop.permute.xlu0 %549
        %551 = vrot.lane.b32.xlu0 %v541, 46
        %v552 = vpop.permute.xlu0 %551
        %553 = vrot.lane.b32.xlu0 %v542, 46
        %v554 = vpop.permute.xlu0 %553
        %vm559 = vcmask 375808
        %v560 = vsel %vm559, %v410, %v548
        %v561 = vsel %vm559, %v411, %v550
        %v562 = vsel %vm559, %v412, %v552
        %v563 = vsel %vm559, %v413, %v554
        %vm564 = vcmask 588800
        %565 = vst.msk [vmem:[%s140] sm:$0xff] %vm564, %v560
        %566 = vst.msk [vmem:[%s140 + $0x8] sm:$0xff] %vm564, %v561
        %567 = vst.msk [vmem:[%s140 + $0x10] sm:$0xff] %vm564, %v562
        %568 = vst.msk [vmem:[%s140 + $0x18] sm:$0xff] %vm564, %v563
        %s569 = sand.u32 %s52, 1
        %s570 = scalar_lea.sflag [#allocation4], %s569
        %s571 = sand.u32 %s52, 1
        %s572 = smul.addr %s571, 32
        %s573 = scalar_lea.vmem [#allocation5], %s572
        // Predicated region
        $region29: #{tpu_custom_call.1} parent=23 // pred_check
          %p574 = pneg %p62
        $region30: #{tpu_custom_call.1} parent=23 // pred_check_branch
          %576 = sbr.rel (%p574) target = $region32
        $region31: #{tpu_custom_call.1} parent=23 // pred_region
          %s577 = smul.u32 4, %s18
          %s578 = ssub.s32 7, %s577
          %p579 = scmp.lt.s32.totalorder %s578, 4
          %s580 = scalar_select %p579, %s578, 4
          %s581 = smul.u32 128, %s580
          %s583 = ssub.s32 512, %s581
          %584 = vsyncadd %s570, %s583
          %p585 = scmp.ne.s32.totalorder 0, %s581
          %s586 = smul.addr %s577, 128
          %s587 = scalar_lea.hbm %s1, %s586
          %s588 = smul.u32 8, %s580
          %s589 = sshll.u32 %s573, 4
          %s590 = int_to_ptr.vmem [resolvable:$true] %s589
          %s591 = sshll.u32 %s588, 4
          %595 = dma.vmem_to_hbm [thread:$0]  (%p585), %s590, %s591, %s587, %s570, 128, 128, 8
        $region32: #{tpu_custom_call.1} parent=23 // pred_fallthru
          _
      $region24: #{tpu_custom_call.1} parent=5 // pred_fallthru
        _
      %p596 = scmp.le.s32.totalorder 2, %s13
      // Predicated region
      $region33: #{tpu_custom_call.1} parent=5 // pred_check
        %p597 = pneg %p596
      $region34: #{tpu_custom_call.1} parent=5 // pred_check_branch
        %599 = sbr.rel (%p597) target = $region36
      $region35: #{tpu_custom_call.1} parent=5 // pred_region
        %s600 = ssub.s32 %s13, 2
        // Predicated region
        $region37: #{tpu_custom_call.1} parent=35 // pred_check
          %p601 = pneg %p68
        $region38: #{tpu_custom_call.1} parent=35 // pred_check_branch
          %603 = sbr.rel (%p601) target = $region40
        $region39: #{tpu_custom_call.1} parent=35 // pred_region
          %s604 = sand.u32 %s53, 1
          %s605 = scalar_lea.sflag [#allocation4], %s604
          %s606 = sand.u32 %s53, 1
          %s607 = smul.addr %s606, 32
          %s608 = scalar_lea.vmem [#allocation5], %s607
          %609 = dma.done %s605, 512
        $region40: #{tpu_custom_call.1} parent=35 // pred_fallthru
          _
      $region36: #{tpu_custom_call.1} parent=5 // pred_fallthru
        _
    $region6: #{tpu_custom_call.1} parent=1 // loop_footer
      %s17 = sadd.s32 1, %s13
    $region7: #{tpu_custom_call.1} parent=1 // loop_footer_branch
      %12 = sbr.rel target = $region3
    $region8: #{tpu_custom_call.1} parent=1 // loop_exit
      _
    %610 = vsyncpa [#allocation3], 1
    %s611 = scalar_lea.sflag [#allocation3], 1
    %612 = vsyncpa %s611, 1
    %613 = vsyncpa [#allocation4], 1
    %s614 = scalar_lea.sflag [#allocation4], 1
    %615 = vsyncpa %s614, 1

</llo_original>
